<compile_context>
chip_gen: v6e
topology: v6e:2x2x1
jax: 0.10.0
libtpu: 0.0.40
codegen_flags: <defaults>
</compile_context>

<pallas_src>
import functools

import jax
import jax.numpy as jnp
from jax.experimental import pallas as pl
from jax.experimental.pallas import tpu as pltpu

LANE = 128        # lanes per vreg
SUBLANE = 8       # sublanes per vreg
CHUNK_ROWS = 128  # rows consumed per inner-loop step (16 f32 vregs per input)


def _round_up(x, m):
    return ((x + m - 1) // m) * m


def _hw_config():
    """Returns (input_vmem_budget_bytes, vmem_limit_bytes, likely_multi_core)."""
    kind = ""
    try:
        kind = jax.devices()[0].device_kind.lower()
    except Exception:
        pass
    single_core_big_vmem = (
        ("v6" in kind) or ("v5e" in kind) or ("v5 lite" in kind) or ("v5lite" in kind)
    )
    if single_core_big_vmem:
        # v5e / v6e: 128 MiB physical VMEM, one TensorCore -> bigger slabs, no split.
        return 32 * 1024 * 1024, 64 * 1024 * 1024, False
    # v7x (64 MiB VMEM, 2 TCs), v4/v5p (megacore) and unknown parts: conservative
    # slab size that double-buffers safely, and the reduction-axis split enabled.
    return 16 * 1024 * 1024, 32 * 1024 * 1024, True


def _partial_sums(ref_ref, est_ref, n_chunks, *, unroll):
    """Unmasked sum of r*r and (e-r)^2 over the first n_chunks full chunks."""
    zero = jnp.zeros((SUBLANE, LANE), jnp.float32)

    def inner(j, carry):
        rr, dd = carry
        start = pl.multiple_of(j * CHUNK_ROWS, CHUNK_ROWS)
        r = ref_ref[pl.ds(start, CHUNK_ROWS), :].astype(jnp.float32)   # (128, 128)
        e = est_ref[pl.ds(start, CHUNK_ROWS), :].astype(jnp.float32)
        d = e - r
        # Group rows into whole (8,128) vreg tiles: pure cross-vreg VPU adds,
        # no XLU work in the hot loop.
        r4 = r.reshape(CHUNK_ROWS // SUBLANE, SUBLANE, LANE)
        d4 = d.reshape(CHUNK_ROWS // SUBLANE, SUBLANE, LANE)
        return rr + jnp.sum(r4 * r4, axis=0), dd + jnp.sum(d4 * d4, axis=0)

    if n_chunks <= 0:
        return zero, zero
    return jax.lax.fori_loop(0, n_chunks, inner, (zero, zero),
                             unroll=min(unroll, n_chunks))


def _sdr_kernel(ref_ref, est_ref, rr_ref, dd_ref, *,
                rows, rows_per_block, num_k, num_k_s):
    sp = pl.program_id(0)          # parallel split of the reduction axis
    k = pl.program_id(2)           # step within this split
    gk = sp * num_k_s + k          # global block index along the row axis

    @pl.when(k == 0)
    def _():
        rr_ref[...] = jnp.zeros_like(rr_ref)
        dd_ref[...] = jnp.zeros_like(dd_ref)

    n_inner_full = rows_per_block // CHUNK_ROWS
    last_rows = rows - (num_k - 1) * rows_per_block     # valid rows in final block
    n_full_last = last_rows // CHUNK_ROWS
    tail_rows = last_rows % CHUNK_ROWS

    # Steady state: every block except the global last one is fully valid -> no mask.
    if num_k > 1:
        @pl.when(gk < num_k - 1)
        def _():
            rr, dd = _partial_sums(ref_ref, est_ref, n_inner_full, unroll=2)
            rr_ref[...] += rr
            dd_ref[...] += dd

    # Final block of the reduction axis: unmasked full chunks, then one masked tail
    # chunk.  Steps with gk >= num_k (clamped overhang of an uneven split) fall
    # through both branches and contribute nothing.
    @pl.when(gk == num_k - 1)
    def _():
        rr, dd = _partial_sums(ref_ref, est_ref, n_full_last, unroll=2)
        if tail_rows > 0:
            start = n_full_last * CHUNK_ROWS
            r = ref_ref[pl.ds(start, CHUNK_ROWS), :].astype(jnp.float32)
            e = est_ref[pl.ds(start, CHUNK_ROWS), :].astype(jnp.float32)
            row = jax.lax.broadcasted_iota(jnp.int32, (CHUNK_ROWS, LANE), 0)
            valid = row < tail_rows            # static bound -> constant mask
            r = jnp.where(valid, r, 0.0)       # mask BEFORE products (drops stale/NaN)
            e = jnp.where(valid, e, 0.0)
            d = e - r
            r4 = r.reshape(CHUNK_ROWS // SUBLANE, SUBLANE, LANE)
            d4 = d.reshape(CHUNK_ROWS // SUBLANE, SUBLANE, LANE)
            rr = rr + jnp.sum(r4 * r4, axis=0)
            dd = dd + jnp.sum(d4 * d4, axis=0)
        rr_ref[...] += rr
        dd_ref[...] += dd


def sdr(estimates, references, *, max_rows_per_block=None, force_split=None):
    """Pallas equivalent of SDR.forward(estimates, references) -> (B,)."""
    if estimates.dtype != references.dtype:
        estimates = estimates.astype(references.dtype)

    B = references.shape[0]
    length = min(references.shape[-1], estimates.shape[-1])
    # TODO(synk): when time lengths differ these slices materialize a copy of the
    # longer input; a (B, C, T)-layout grid would stream it without the copy.
    if references.shape[-1] != length:
        references = references[..., :length]
    if estimates.shape[-1] != length:
        estimates = estimates[..., :length]
    ref2 = references.reshape(B, -1)
    est2 = estimates.reshape(B, -1)

    n = ref2.shape[1]
    lane_pad = (-n) % LANE
    if lane_pad:
        # TODO(synk): this pad copies both inputs through HBM once; an in-kernel
        # ragged-lane mask would avoid it but needs a non-reshaped 1-D block layout.
        ref2 = jnp.pad(ref2, ((0, 0), (0, lane_pad)))
        est2 = jnp.pad(est2, ((0, 0), (0, lane_pad)))
    rows = ref2.shape[1] // LANE
    # Free reshapes (metadata only): samples fill sublanes AND lanes.
    ref3 = ref2.reshape(B, rows, LANE)
    est3 = est2.reshape(B, rows, LANE)

    input_budget, vmem_limit, multi_core = _hw_config()
    itemsize = jnp.dtype(ref3.dtype).itemsize
    r_budget = input_budget // (2 * 2 * LANE * itemsize)   # 2 inputs x 2 pipeline bufs
    r_budget = max(CHUNK_ROWS, (r_budget // CHUNK_ROWS) * CHUNK_ROWS)
    if max_rows_per_block is not None:
        r_budget = min(r_budget,
                       max(CHUNK_ROWS, (max_rows_per_block // CHUNK_ROWS) * CHUNK_ROWS))
    rows_per_block = min(r_budget, _round_up(rows, CHUNK_ROWS))
    num_k = pl.cdiv(rows, rows_per_block)

    # Optional parallel split of the reduction axis: engages both TensorCores on
    # multi-core parts when B == 1 or B is odd.  Costs at most one redundant
    # (skipped) block fetch per split when num_k is odd.
    want_split = (multi_core and (B % 2 == 1)) if force_split is None else force_split
    S = 2 if (want_split and num_k >= 2) else 1
    num_k_s = pl.cdiv(num_k, S)
    needs_clamp = (S * num_k_s) != num_k

    def block_index(sp, k):
        gk = sp * num_k_s + k
        if needs_clamp:
            gk = jnp.minimum(gk, num_k - 1)   # keep the skipped overhang step in-bounds
        return gk

    def in_map(sp, b, k):
        return (b, block_index(sp, k), 0)

    def out_map(sp, b, k):
        return (sp, b, 0, 0)

    kernel = functools.partial(
        _sdr_kernel,
        rows=rows,
        rows_per_block=rows_per_block,
        num_k=num_k,
        num_k_s=num_k_s,
    )

    rr_out, dd_out = pl.pallas_call(
        kernel,
        out_shape=(
            jax.ShapeDtypeStruct((S, B, SUBLANE, LANE), jnp.float32),
            jax.ShapeDtypeStruct((S, B, SUBLANE, LANE), jnp.float32),
        ),
        grid_spec=pltpu.PrefetchScalarGridSpec(
            num_scalar_prefetch=0,
            grid=(S, B, num_k_s),
            in_specs=[
                pl.BlockSpec((None, rows_per_block, LANE), in_map),
                pl.BlockSpec((None, rows_per_block, LANE), in_map),
            ],
            out_specs=[
                pl.BlockSpec((None, None, SUBLANE, LANE), out_map),
                pl.BlockSpec((None, None, SUBLANE, LANE), out_map),
            ],
        ),
        compiler_params=pltpu.CompilerParams(
            dimension_semantics=("parallel", "parallel", "arbitrary"),
            vmem_limit_bytes=vmem_limit,
        ),
    )(ref3, est3)

    # Tiny epilogue (cross-split combine + log10) in plain XLA.
    delta = jnp.float32(1e-07)
    num = jnp.sum(rr_out, axis=(0, 2, 3)) + delta
    # den = ||r||^2 + ||e||^2 - 2<e,r> == ||e - r||^2 >= 0, so relu() is a no-op;
    # this differs from the torch expression only by float association.
    den = jnp.sum(dd_out, axis=(0, 2, 3)) + delta
    out = 10.0 * (jnp.log10(num) - jnp.log10(den))
    return out.astype(references.dtype)


def sdr_reference(estimates, references):
    """Pure-JAX reference matching the PyTorch forward."""
    estimates = estimates.astype(references.dtype)
    length = min(references.shape[-1], estimates.shape[-1])
    B = references.shape[0]
    r = references[..., :length].reshape(B, -1)
    e = estimates[..., :length].reshape(B, -1)
    delta = 1e-07
    num = jnp.einsum("bi,bi->b", r, r)
    den = num + jnp.einsum("bi,bi->b", e, e) - 2 * jnp.einsum("bi,bi->b", e, r)
    den = jnp.log10(jnp.maximum(den, 0.0) + delta)
    num = jnp.log10(num + delta)
    return 10 * (num - den)


if __name__ == "__main__":
    key = jax.random.PRNGKey(0)
    k1, k2 = jax.random.split(key)

    # Case 1: N = 4*2336 = 9344 = 73*128 -> lane aligned (no pad copy), one partial
    # block -> masked tail chunk; estimates longer -> truncation path.
    B, C, T_ref, T_est = 2, 4, 2336, 2400
    references = jax.random.normal(k1, (B, C, T_ref), dtype=jnp.float32)
    noise = 0.1 * jax.random.normal(k2, (B, C, T_est), dtype=jnp.float32)
    estimates = jnp.pad(references, ((0, 0), (0, 0), (0, T_est - T_ref))) + noise
    out = jax.block_until_ready(sdr(estimates, references))
    ref_out = sdr_reference(estimates, references)
    assert out.shape == (B,), out.shape
    assert jnp.allclose(out, ref_out, rtol=1e-4, atol=1e-4), (out, ref_out)

    # Case 2: flattened length not a multiple of 128 (minimal-pad fallback),
    # equal lengths, odd batch size with a single reduction block.
    k3, k4 = jax.random.split(k2)
    refs2 = jax.random.normal(k3, (3, 2, 50), dtype=jnp.float32)
    ests2 = refs2 + 0.2 * jax.random.normal(k4, (3, 2, 50), dtype=jnp.float32)
    out2 = jax.block_until_ready(sdr(ests2, refs2))
    ref_out2 = sdr_reference(ests2, refs2)
    assert out2.shape == (3,), out2.shape
    assert jnp.allclose(out2, ref_out2, rtol=1e-4, atol=1e-4), (out2, ref_out2)

    # Case 3: batch 1 with forced reduction-axis split and tiny blocks so that
    # num_k = 3 (odd): exercises the parallel split, the clamped/skipped overhang
    # step, the unmasked steady-state loop and the masked tail chunk.
    k5, k6 = jax.random.split(k4)
    T3 = 300 * 128 + 50            # n = 38450 -> pads to 301 rows of 128
    refs3 = jax.random.normal(k5, (1, 1, T3), dtype=jnp.float32)
    ests3 = refs3 + 0.1 * jax.random.normal(k6, (1, 1, T3), dtype=jnp.float32)
    out3 = jax.block_until_ready(
        sdr(ests3, refs3, max_rows_per_block=128, force_split=True))
    ref_out3 = sdr_reference(ests3, refs3)
    assert out3.shape == (1,), out3.shape
    assert jnp.allclose(out3, ref_out3, rtol=1e-4, atol=1e-4), (out3, ref_out3)

    print("KERNEL_OK")
</pallas_src>

<mosaic_0001>
module attributes {stable_mosaic.version = 11 : i64} {
  func.func @_sdr_kernel(%arg0: i32, %arg1: i32, %arg2: i32, %arg3: memref<1x128x128xf32, #tpu.memory_space<vmem>>, %arg4: memref<1x128x128xf32, #tpu.memory_space<vmem>>, %arg5: memref<1x1x8x128xf32, #tpu.memory_space<vmem>>, %arg6: memref<1x1x8x128xf32, #tpu.memory_space<vmem>>) attributes {dimension_semantics = [#tpu.dimension_semantics<parallel>, #tpu.dimension_semantics<parallel>, #tpu.dimension_semantics<arbitrary>], iteration_bounds = array<i64: 1, 2, 1>, scalar_prefetch = 0 : i64, scratch_operands = 0 : i64, tpu.core_type = #tpu.core_type<tc>, window_params = [{transform_indices = @transform_0, window_bounds = array<i64: 1, 128, 128>}, {transform_indices = @transform_1, window_bounds = array<i64: 1, 128, 128>}, {transform_indices = @transform_2, window_bounds = array<i64: 1, 1, 8, 128>}, {transform_indices = @transform_3, window_bounds = array<i64: 1, 1, 8, 128>}]} {
    %c1_i32 = arith.constant 1 : i32
    %0 = arith.muli %arg0, %c1_i32 : i32
    %1 = arith.addi %0, %arg2 : i32
    %c0_i32 = arith.constant 0 : i32
    %2 = arith.cmpi eq, %arg2, %c0_i32 : i32
    %3 = arith.extui %2 : i1 to i32
    %c0_i32_0 = arith.constant 0 : i32
    %4 = arith.cmpi ne, %3, %c0_i32_0 : i32
    scf.if %4 {
      %cst = arith.constant 0.000000e+00 : f32
      %8 = vector.broadcast %cst : f32 to vector<8x128xf32>
      %c0 = arith.constant 0 : index
      %c0_3 = arith.constant 0 : index
      %c0_4 = arith.constant 0 : index
      %c0_5 = arith.constant 0 : index
      %9 = vector.load %arg5[%c0, %c0_3, %c0_4, %c0_5] : memref<1x1x8x128xf32, #tpu.memory_space<vmem>>, vector<1x1x8x128xf32>
      %10 = vector.shape_cast %9 : vector<1x1x8x128xf32> to vector<8x128xf32>
      %11 = vector.shape_cast %8 : vector<8x128xf32> to vector<1x1x8x128xf32>
      tpu.vector_store %arg5[%c0, %c0_3, %c0_4, %c0_5], %11 {strides = array<i32>} : memref<1x1x8x128xf32, #tpu.memory_space<vmem>>, vector<1x1x8x128xf32>,
      %cst_6 = arith.constant 0.000000e+00 : f32
      %12 = vector.broadcast %cst_6 : f32 to vector<8x128xf32>
      %c0_7 = arith.constant 0 : index
      %c0_8 = arith.constant 0 : index
      %c0_9 = arith.constant 0 : index
      %c0_10 = arith.constant 0 : index
      %13 = vector.load %arg6[%c0_7, %c0_8, %c0_9, %c0_10] : memref<1x1x8x128xf32, #tpu.memory_space<vmem>>, vector<1x1x8x128xf32>
      %14 = vector.shape_cast %13 : vector<1x1x8x128xf32> to vector<8x128xf32>
      %15 = vector.shape_cast %12 : vector<8x128xf32> to vector<1x1x8x128xf32>
      tpu.vector_store %arg6[%c0_7, %c0_8, %c0_9, %c0_10], %15 {strides = array<i32>} : memref<1x1x8x128xf32, #tpu.memory_space<vmem>>, vector<1x1x8x128xf32>,
    } else {
    }
    %c0_i32_1 = arith.constant 0 : i32
    %5 = arith.cmpi eq, %1, %c0_i32_1 : i32
    %6 = arith.extui %5 : i1 to i32
    %c0_i32_2 = arith.constant 0 : i32
    %7 = arith.cmpi ne, %6, %c0_i32_2 : i32
    scf.if %7 {
      %cst = arith.constant 0.000000e+00 : f32
      %8 = vector.broadcast %cst : f32 to vector<8x128xf32>
      %c0 = arith.constant 0 : index
      %c0_3 = arith.constant 0 : index
      %c0_4 = arith.constant 0 : index
      %9 = vector.load %arg3[%c0, %c0_3, %c0_4] : memref<1x128x128xf32, #tpu.memory_space<vmem>>, vector<1x128x128xf32>
      %10 = vector.shape_cast %9 : vector<1x128x128xf32> to vector<128x128xf32>
      %c0_5 = arith.constant 0 : index
      %c0_6 = arith.constant 0 : index
      %c0_7 = arith.constant 0 : index
      %11 = vector.load %arg4[%c0_5, %c0_6, %c0_7] : memref<1x128x128xf32, #tpu.memory_space<vmem>>, vector<1x128x128xf32>
      %12 = vector.shape_cast %11 : vector<1x128x128xf32> to vector<128x128xf32>
      %13 = tpu.iota {dimensions = array<i32: 0>} : vector<128x128xi32>
      %c73_i32 = arith.constant 73 : i32
      %14 = vector.broadcast %c73_i32 : i32 to vector<128x128xi32>
      %15 = arith.cmpi slt, %13, %14 : vector<128x128xi32>
      %cst_8 = arith.constant 0.000000e+00 : f32
      %16 = vector.broadcast %cst_8 : f32 to vector<128x128xf32>
      %17 = arith.select %15, %10, %16 : vector<128x128xi1>, vector<128x128xf32>
      %cst_9 = arith.constant 0.000000e+00 : f32
      %18 = vector.broadcast %cst_9 : f32 to vector<128x128xf32>
      %19 = arith.select %15, %12, %18 : vector<128x128xi1>, vector<128x128xf32>
      %20 = arith.subf %19, %17 : vector<128x128xf32>
      %21 = vector.shape_cast %17 : vector<128x128xf32> to vector<16x8x128xf32>
      %22 = vector.shape_cast %20 : vector<128x128xf32> to vector<16x8x128xf32>
      %23 = arith.mulf %21, %21 : vector<16x8x128xf32>
      %cst_10 = arith.constant dense<0.000000e+00> : vector<8x128xf32>
      %24 = vector.multi_reduction <add>, %23, %cst_10 [0] : vector<16x8x128xf32> to vector<8x128xf32>
      %25 = arith.addf %8, %24 : vector<8x128xf32>
      %26 = arith.mulf %22, %22 : vector<16x8x128xf32>
      %cst_11 = arith.constant dense<0.000000e+00> : vector<8x128xf32>
      %27 = vector.multi_reduction <add>, %26, %cst_11 [0] : vector<16x8x128xf32> to vector<8x128xf32>
      %28 = arith.addf %8, %27 : vector<8x128xf32>
      %c0_12 = arith.constant 0 : index
      %c0_13 = arith.constant 0 : index
      %c0_14 = arith.constant 0 : index
      %c0_15 = arith.constant 0 : index
      %29 = vector.load %arg5[%c0_12, %c0_13, %c0_14, %c0_15] : memref<1x1x8x128xf32, #tpu.memory_space<vmem>>, vector<1x1x8x128xf32>
      %30 = vector.shape_cast %29 : vector<1x1x8x128xf32> to vector<8x128xf32>
      %31 = arith.addf %30, %25 : vector<8x128xf32>
      %c0_16 = arith.constant 0 : index
      %c0_17 = arith.constant 0 : index
      %c0_18 = arith.constant 0 : index
      %c0_19 = arith.constant 0 : index
      %32 = vector.load %arg5[%c0_16, %c0_17, %c0_18, %c0_19] : memref<1x1x8x128xf32, #tpu.memory_space<vmem>>, vector<1x1x8x128xf32>
      %33 = vector.shape_cast %32 : vector<1x1x8x128xf32> to vector<8x128xf32>
      %34 = vector.shape_cast %31 : vector<8x128xf32> to vector<1x1x8x128xf32>
      tpu.vector_store %arg5[%c0_16, %c0_17, %c0_18, %c0_19], %34 {strides = array<i32>} : memref<1x1x8x128xf32, #tpu.memory_space<vmem>>, vector<1x1x8x128xf32>,
      %c0_20 = arith.constant 0 : index
      %c0_21 = arith.constant 0 : index
      %c0_22 = arith.constant 0 : index
      %c0_23 = arith.constant 0 : index
      %35 = vector.load %arg6[%c0_20, %c0_21, %c0_22, %c0_23] : memref<1x1x8x128xf32, #tpu.memory_space<vmem>>, vector<1x1x8x128xf32>
      %36 = vector.shape_cast %35 : vector<1x1x8x128xf32> to vector<8x128xf32>
      %37 = arith.addf %36, %28 : vector<8x128xf32>
      %c0_24 = arith.constant 0 : index
      %c0_25 = arith.constant 0 : index
      %c0_26 = arith.constant 0 : index
      %c0_27 = arith.constant 0 : index
      %38 = vector.load %arg6[%c0_24, %c0_25, %c0_26, %c0_27] : memref<1x1x8x128xf32, #tpu.memory_space<vmem>>, vector<1x1x8x128xf32>
      %39 = vector.shape_cast %38 : vector<1x1x8x128xf32> to vector<8x128xf32>
      %40 = vector.shape_cast %37 : vector<8x128xf32> to vector<1x1x8x128xf32>
      tpu.vector_store %arg6[%c0_24, %c0_25, %c0_26, %c0_27], %40 {strides = array<i32>} : memref<1x1x8x128xf32, #tpu.memory_space<vmem>>, vector<1x1x8x128xf32>,
    } else {
    }
    return
  }
  func.func @transform_0(%arg0: i32, %arg1: i32, %arg2: i32) -> (i32, i32, i32) {
    %c1_i32 = arith.constant 1 : i32
    %0 = arith.muli %arg0, %c1_i32 : i32
    %1 = arith.addi %0, %arg2 : i32
    %c0_i32 = arith.constant 0 : i32
    %c0_i32_0 = arith.constant 0 : i32
    return %arg1, %1, %c0_i32 : i32, i32, i32
  }
  func.func @transform_1(%arg0: i32, %arg1: i32, %arg2: i32) -> (i32, i32, i32) {
    %c1_i32 = arith.constant 1 : i32
    %0 = arith.muli %arg0, %c1_i32 : i32
    %1 = arith.addi %0, %arg2 : i32
    %c0_i32 = arith.constant 0 : i32
    %c0_i32_0 = arith.constant 0 : i32
    return %arg1, %1, %c0_i32 : i32, i32, i32
  }
  func.func @transform_2(%arg0: i32, %arg1: i32, %arg2: i32) -> (i32, i32, i32, i32) {
    %c0_i32 = arith.constant 0 : i32
    %c0_i32_0 = arith.constant 0 : i32
    %c0_i32_1 = arith.constant 0 : i32
    return %arg0, %arg1, %c0_i32, %c0_i32_0 : i32, i32, i32, i32
  }
  func.func @transform_3(%arg0: i32, %arg1: i32, %arg2: i32) -> (i32, i32, i32, i32) {
    %c0_i32 = arith.constant 0 : i32
    %c0_i32_0 = arith.constant 0 : i32
    %c0_i32_1 = arith.constant 0 : i32
    return %arg0, %arg1, %c0_i32, %c0_i32_0 : i32, i32, i32, i32
  }
}

</mosaic_0001>

<llo_original>
// kernel: tpu_custom_call.1
$region0: #{tpu_custom_call.1}
  #allocation0 [shape = 'u32[]', space=smem, size = 0x4, offset = 0x4, fixed_abs, tag = 'smem constant byte address 0x4 - core index']
  #allocation1 [shape = 'u32[144,128]{1,0:T(1,128)}', space=vmem, size = 0x12000, scoped, tag = 'internal scratch']
  %s0 = inlined_call_operand.vmem [shape: f32[2,73,128], index: 0, kind: input, shape index: {}]
  %s1 = inlined_call_operand.vmem [shape: f32[2,73,128], index: 1, kind: input, shape index: {}]
  %s2 = inlined_call_operand.hbm [shape: f32[1,2,8,128], index: 2, kind: output, shape index: {0}]
  %s3 = inlined_call_operand.hbm [shape: f32[1,2,8,128], index: 3, kind: output, shape index: {1}]
  %4 = xla_tuple %s2, %s3
  %s5 = sld [smem:[#allocation0]]
  $region57: #{tpu_custom_call.1} parent=0
    _
  %s7 = ssub.s32 1, %s5
  %s8 = scalar_select 0, %s7, %s5
  $region1: #{tpu_custom_call.1} parent=0
    #allocation2 [shape = 'u8[8192]{0}', space=vmem, size = 0x2000, scoped, tag = 'output window, operand 0']
    #allocation3 [shape = 's32[2]{0}', space=sflag, size = 0x8, scoped, tag = 'scoped memory for tpu_custom_call.1']
    #allocation4 [shape = 'u8[8192]{0}', space=vmem, size = 0x2000, scoped, tag = 'output window, operand 1']
    #allocation5 [shape = 's32[2]{0}', space=sflag, size = 0x8, scoped, tag = 'scoped memory for tpu_custom_call.1']
    %9 = vsyncpa [#allocation3], 0
    %s10 = scalar_lea.sflag [#allocation3], 1
    %11 = vsyncpa %s10, 0
    %12 = vsyncpa [#allocation5], 0
    %s13 = scalar_lea.sflag [#allocation5], 1
    %14 = vsyncpa %s13, 0
    loop: start=0, step=1, limit=4
    $region2: #{tpu_custom_call.1} parent=1 // loop_pre_header
      _
    $region3: #{tpu_custom_call.1} parent=1 // loop_header
      %s16 = sphi 0, %s20
      %p17 = scmp.ge.s32.totalorder %s16, 4
      %s23 = sphi 0, %s42
      %s24 = sphi 0, %s38
      %s25 = sphi 0, %s34
      %s26 = sphi 0, %s23
      %s27 = sphi 0, %s24
      %s28 = sphi 0, %s25
      %s29 = sphi 0, %s26
      %s30 = sphi 0, %s27
      %s31 = sphi 0, %s28
      %s49 = sphi 0, %s51
      %s52 = sphi 0, %s49
      %s53 = sphi 0, %s52
      %s69 = sphi 0, %s53
      %s79 = sphi 0, %s81
      %s82 = sphi 0, %s79
      %s83 = sphi 0, %s82
      %s99 = sphi 0, %s83
      %s107 = sphi 0, %s109
      %s110 = sphi 0, %s107
      %s111 = sphi 0, %s110
      %s127 = sphi 0, %s111
      %s135 = sphi 0, %s137
      %s138 = sphi 0, %s135
      %s139 = sphi 0, %s138
      %s155 = sphi 0, %s139
    $region4: #{tpu_custom_call.1} parent=1 // loop_header_branch
      %19 = sbr.rel (%p17) target = $region8
    $region5: #{tpu_custom_call.1} parent=1 // loop_body
      %s21 = ssub.s32 %s16, 1
      %s22 = ssub.s32 %s16, 2
      %s32 = sadd.s32 1, %s25
      %p33 = scmp.ge.s32.totalorder %s32, 1
      %s34 = scalar_select %p33, 0, %s32
      %s35 = sadd.s32 1, %s24
      %s36 = scalar_select %p33, %s35, %s24
      %p37 = scmp.ge.s32.totalorder %s36, 2
      %s38 = scalar_select %p37, 0, %s36
      %s39 = sadd.s32 1, %s23
      %s40 = scalar_select %p37, %s39, %s23
      %p41 = scmp.ge.s32.totalorder %s40, 1
      %s42 = scalar_select %p41, 0, %s40
      %s43 = sadd.s32 %s23, %s25
      %s44 = sadd.s32 %s42, %s34
      %s45 = ssub.s32 %s24, %s38
      %s46 = ssub.s32 %s43, %s44
      %s47 = sor.u32 %s45, %s46
      %p48 = scmp.eq.s32.totalorder %s47, 0
      %s50 = sadd.s32 %s49, 1
      %s51 = scalar_select %p48, %s49, %s50
      %p54 = pneg %p48
      %p55 = scmp.eq.s32.totalorder %s16, 1
      %p56 = por %p54, %p55
      %p57 = scmp.ne.s32.totalorder %s49, %s52
      %p58 = scmp.eq.s32.totalorder %s16, 0
      %p59 = por %p57, %p58
      %p60 = scmp.ne.s32.totalorder %s49, %s52
      %p61 = scmp.eq.s32.totalorder %s21, 1
      %p62 = por %p60, %p61
      %p63 = scmp.ne.s32.totalorder %s52, %s53
      %p64 = scmp.eq.s32.totalorder %s21, 0
      %p65 = por %p63, %p64
      %p66 = scmp.ne.s32.totalorder %s52, %s53
      %p67 = scmp.eq.s32.totalorder %s22, 1
      %p68 = por %p66, %p67
      %p70 = scmp.ne.s32.totalorder %s53, %s69
      %p71 = scmp.eq.s32.totalorder %s22, 0
      %p72 = por %p70, %p71
      %s73 = sadd.s32 %s23, %s25
      %s74 = sadd.s32 %s42, %s34
      %s75 = ssub.s32 %s24, %s38
      %s76 = ssub.s32 %s73, %s74
      %s77 = sor.u32 %s75, %s76
      %p78 = scmp.eq.s32.totalorder %s77, 0
      %s80 = sadd.s32 %s79, 1
      %s81 = scalar_select %p78, %s79, %s80
      %p84 = pneg %p78
      %p85 = scmp.eq.s32.totalorder %s16, 1
      %p86 = por %p84, %p85
      %p87 = scmp.ne.s32.totalorder %s79, %s82
      %p88 = scmp.eq.s32.totalorder %s16, 0
      %p89 = por %p87, %p88
      %p90 = scmp.ne.s32.totalorder %s79, %s82
      %p91 = scmp.eq.s32.totalorder %s21, 1
      %p92 = por %p90, %p91
      %p93 = scmp.ne.s32.totalorder %s82, %s83
      %p94 = scmp.eq.s32.totalorder %s21, 0
      %p95 = por %p93, %p94
      %p96 = scmp.ne.s32.totalorder %s82, %s83
      %p97 = scmp.eq.s32.totalorder %s22, 1
      %p98 = por %p96, %p97
      %p100 = scmp.ne.s32.totalorder %s83, %s99
      %p101 = scmp.eq.s32.totalorder %s22, 0
      %p102 = por %p100, %p101
      %s103 = ssub.s32 %s23, %s42
      %s104 = ssub.s32 %s24, %s38
      %s105 = sor.u32 %s103, %s104
      %p106 = scmp.eq.s32.totalorder %s105, 0
      %s108 = sadd.s32 %s107, 1
      %s109 = scalar_select %p106, %s107, %s108
      %p112 = pneg %p106
      %p113 = scmp.eq.s32.totalorder %s16, 1
      %p114 = por %p112, %p113
      %p115 = scmp.ne.s32.totalorder %s107, %s110
      %p116 = scmp.eq.s32.totalorder %s16, 0
      %p117 = por %p115, %p116
      %p118 = scmp.ne.s32.totalorder %s107, %s110
      %p119 = scmp.eq.s32.totalorder %s21, 1
      %p120 = por %p118, %p119
      %p121 = scmp.ne.s32.totalorder %s110, %s111
      %p122 = scmp.eq.s32.totalorder %s21, 0
      %p123 = por %p121, %p122
      %p124 = scmp.ne.s32.totalorder %s110, %s111
      %p125 = scmp.eq.s32.totalorder %s22, 1
      %p126 = por %p124, %p125
      %p128 = scmp.ne.s32.totalorder %s111, %s127
      %p129 = scmp.eq.s32.totalorder %s22, 0
      %p130 = por %p128, %p129
      %s131 = ssub.s32 %s23, %s42
      %s132 = ssub.s32 %s24, %s38
      %s133 = sor.u32 %s131, %s132
      %p134 = scmp.eq.s32.totalorder %s133, 0
      %s136 = sadd.s32 %s135, 1
      %s137 = scalar_select %p134, %s135, %s136
      %p140 = pneg %p134
      %p141 = scmp.eq.s32.totalorder %s16, 1
      %p142 = por %p140, %p141
      %p143 = scmp.ne.s32.totalorder %s135, %s138
      %p144 = scmp.eq.s32.totalorder %s16, 0
      %p145 = por %p143, %p144
      %p146 = scmp.ne.s32.totalorder %s135, %s138
      %p147 = scmp.eq.s32.totalorder %s21, 1
      %p148 = por %p146, %p147
      %p149 = scmp.ne.s32.totalorder %s138, %s139
      %p150 = scmp.eq.s32.totalorder %s21, 0
      %p151 = por %p149, %p150
      %p152 = scmp.ne.s32.totalorder %s138, %s139
      %p153 = scmp.eq.s32.totalorder %s22, 1
      %p154 = por %p152, %p153
      %p156 = scmp.ne.s32.totalorder %s139, %s155
      %p157 = scmp.eq.s32.totalorder %s22, 0
      %p158 = por %p156, %p157
      %p159 = scmp.le.s32.totalorder 1, %s16
      %p160 = scmp.lt.s32.totalorder %s16, 3
      %p161 = pnand %p159, %p160
      %p162 = pneg %p161
      // Predicated region
      $region9: #{tpu_custom_call.1} parent=5 // pred_check
        _
      $region10: #{tpu_custom_call.1} parent=5 // pred_check_branch
        %164 = sbr.rel (%p161) target = $region12
      $region11: #{tpu_custom_call.1} parent=5 // pred_region
        %s165 = ssub.s32 %s16, 1
      $region12: #{tpu_custom_call.1} parent=5 // pred_fallthru
        _
      %p166 = scmp.lt.s32.totalorder %s16, 2
      // Predicated region
      $region13: #{tpu_custom_call.1} parent=5 // pred_check
        %p167 = pneg %p166
      $region14: #{tpu_custom_call.1} parent=5 // pred_check_branch
        %169 = sbr.rel (%p167) target = $region16
      $region15: #{tpu_custom_call.1} parent=5 // pred_region
        // Predicated region
        $region17: #{tpu_custom_call.1} parent=15 // pred_check
          %p170 = pneg %p59
        $region18: #{tpu_custom_call.1} parent=15 // pred_check_branch
          %172 = sbr.rel (%p170) target = $region20
        $region19: #{tpu_custom_call.1} parent=15 // pred_region
          %s173 = sadd.s32 %s23, %s25
          %s174 = smul.u32 16, %s173
          %s175 = ssub.s32 10, %s174
          %s176 = smul.u32 128, %s175
          %p177 = scmp.lt.s32.totalorder %s24, 1
          %s178 = scalar_select %p177, %s24, 1
          %p179 = scmp.lt.s32.totalorder %s174, 9
          %s180 = scalar_select %p179, %s174, 9
          %s181 = smul.addr %s178, 10
          %s182 = sadd.s32 %s180, %s181
          %s183 = smul.addr %s182, 8
          %s184 = scalar_lea.vmem %s0, %s183
          %s185 = sadd.s32 %s23, %s25
          %s186 = smul.u32 16, %s185
          %s187 = ssub.s32 10, %s186
          %s188 = smul.u32 128, %s187
        $region20: #{tpu_custom_call.1} parent=15 // pred_fallthru
          _
        // Predicated region
        $region21: #{tpu_custom_call.1} parent=15 // pred_check
          %p189 = pneg %p89
        $region22: #{tpu_custom_call.1} parent=15 // pred_check_branch
          %191 = sbr.rel (%p189) target = $region24
        $region23: #{tpu_custom_call.1} parent=15 // pred_region
          %s192 = sadd.s32 %s23, %s25
          %s193 = smul.u32 16, %s192
          %s194 = ssub.s32 10, %s193
          %s195 = smul.u32 128, %s194
          %p196 = scmp.lt.s32.totalorder %s24, 1
          %s197 = scalar_select %p196, %s24, 1
          %p198 = scmp.lt.s32.totalorder %s193, 9
          %s199 = scalar_select %p198, %s193, 9
          %s200 = smul.addr %s197, 10
          %s201 = sadd.s32 %s199, %s200
          %s202 = smul.addr %s201, 8
          %s203 = scalar_lea.vmem %s1, %s202
          %s204 = sadd.s32 %s23, %s25
          %s205 = smul.u32 16, %s204
          %s206 = ssub.s32 10, %s205
          %s207 = smul.u32 128, %s206
        $region24: #{tpu_custom_call.1} parent=15 // pred_fallthru
          _
      $region16: #{tpu_custom_call.1} parent=5 // pred_fallthru
        _
      %p208 = scmp.le.s32.totalorder 1, %s16
      %p209 = scmp.lt.s32.totalorder %s16, 3
      %p210 = pnand %p208, %p209
      %p211 = pneg %p210
      // Predicated region
      $region25: #{tpu_custom_call.1} parent=5 // pred_check
        _
      $region26: #{tpu_custom_call.1} parent=5 // pred_check_branch
        %213 = sbr.rel (%p210) target = $region28
      $region27: #{tpu_custom_call.1} parent=5 // pred_region
        %s214 = ssub.s32 %s16, 1
        %s215 = sadd.s32 %s26, %s28
        %s216 = smul.u32 16, %s215
        %s217 = ssub.s32 10, %s216
        %s218 = smul.u32 128, %s217
        %p219 = scmp.lt.s32.totalorder %s27, 1
        %s220 = scalar_select %p219, %s27, 1
        %p221 = scmp.lt.s32.totalorder %s216, 9
        %s222 = scalar_select %p221, %s216, 9
        %s223 = smul.addr %s220, 10
        %s224 = sadd.s32 %s222, %s223
        %s225 = smul.addr %s224, 8
        %s226 = scalar_lea.vmem %s0, %s225
        %p227 = pneg %p65
        %p228 = pneg %p62
        %s229 = sadd.s32 %s26, %s28
        %s230 = smul.u32 16, %s229
        %s231 = ssub.s32 10, %s230
        %s232 = smul.u32 128, %s231
        %p233 = scmp.lt.s32.totalorder %s27, 1
        %s234 = scalar_select %p233, %s27, 1
        %p235 = scmp.lt.s32.totalorder %s230, 9
        %s236 = scalar_select %p235, %s230, 9
        %s237 = smul.addr %s234, 10
        %s238 = sadd.s32 %s236, %s237
        %s239 = smul.addr %s238, 8
        %s240 = scalar_lea.vmem %s1, %s239
        %p241 = pneg %p95
        %p242 = pneg %p92
        %p243 = pneg %p123
        %p244 = pneg %p120
        %s245 = sand.u32 %s110, 1
        %s246 = scalar_lea.sflag [#allocation3], %s245
        %s247 = sand.u32 %s110, 1
        %s248 = smul.addr %s247, 8
        %s249 = scalar_lea.vmem [#allocation2], %s248
        %p250 = pneg %p151
        %p251 = pneg %p148
        %s252 = sand.u32 %s138, 1
        %s253 = scalar_lea.sflag [#allocation5], %s252
        %s254 = sand.u32 %s138, 1
        %s255 = smul.addr %s254, 8
        %s256 = scalar_lea.vmem [#allocation4], %s255
        %s257 = sadd.s32 %s26, %s28
        %s258 = smul.u32 16, %s257
        %s259 = ssub.s32 10, %s258
        %s260 = smul.u32 128, %s259
        %p261 = scmp.lt.s32.totalorder %s27, 1
        %s262 = scalar_select %p261, %s27, 1
        %p263 = scmp.lt.s32.totalorder %s258, 9
        %s264 = scalar_select %p263, %s258, 9
        %s265 = smul.addr %s262, 10
        %s266 = sadd.s32 %s264, %s265
        %s267 = smul.addr %s266, 8
        %s268 = scalar_lea.vmem %s0, %s267
        %s269 = sadd.s32 %s26, %s28
        %s270 = smul.u32 16, %s269
        %s271 = ssub.s32 10, %s270
        %s272 = smul.u32 128, %s271
        %s273 = sadd.s32 %s26, %s28
        %s274 = smul.u32 16, %s273
        %s275 = ssub.s32 10, %s274
        %s276 = smul.u32 128, %s275
        %p277 = scmp.lt.s32.totalorder %s27, 1
        %s278 = scalar_select %p277, %s27, 1
        %p279 = scmp.lt.s32.totalorder %s274, 9
        %s280 = scalar_select %p279, %s274, 9
        %s281 = smul.addr %s278, 10
        %s282 = sadd.s32 %s280, %s281
        %s283 = smul.addr %s282, 8
        %s284 = scalar_lea.vmem %s1, %s283
        %s285 = sadd.s32 %s26, %s28
        %s286 = smul.u32 16, %s285
        %s287 = ssub.s32 10, %s286
        %s288 = smul.u32 128, %s287
        %s289 = sadd.s32 %s26, %s28
        %p290 = scmp.eq.s32.totalorder %s28, 0
        // Predicated region
        $region29: #{tpu_custom_call.1} parent=27 // pred_check
          %p291 = pneg %p290
        $region30: #{tpu_custom_call.1} parent=27 // pred_check_branch
          %293 = sbr.rel (%p291) target = $region32
        $region31: #{tpu_custom_call.1} parent=27 // pred_region
          %294 = vst [vmem:[%s249] sm:$0xff] 0.0
          %295 = vst [vmem:[%s256] sm:$0xff] 0.0
        $region32: #{tpu_custom_call.1} parent=27 // pred_fallthru
          _
        %p296 = scmp.eq.s32.totalorder %s289, 0
        // Predicated region
        $region33: #{tpu_custom_call.1} parent=27 // pred_check
          %p297 = pneg %p296
        $region34: #{tpu_custom_call.1} parent=27 // pred_check_branch
          %299 = sbr.rel (%p297) target = $region36
        $region35: #{tpu_custom_call.1} parent=27 // pred_region
          %v300 = vld [vmem:[%s268] sm:$0xff]
          %v301 = vld [vmem:[%s268 + $0x8] sm:$0xff]
          %v302 = vld [vmem:[%s268 + $0x10] sm:$0xff]
          %v303 = vld [vmem:[%s268 + $0x18] sm:$0xff]
          %v304 = vld [vmem:[%s268 + $0x20] sm:$0xff]
          %v305 = vld [vmem:[%s268 + $0x28] sm:$0xff]
          %v306 = vld [vmem:[%s268 + $0x30] sm:$0xff]
          %v307 = vld [vmem:[%s268 + $0x38] sm:$0xff]
          %v308 = vld [vmem:[%s268 + $0x40] sm:$0xff]
          %v309 = vld [vmem:[%s268 + $0x48] sm:$0xff]
          %v310 = vld [vmem:[%s268 + $0x50] sm:$0xff]
          %v311 = vld [vmem:[%s268 + $0x58] sm:$0xff]
          %v312 = vld [vmem:[%s268 + $0x60] sm:$0xff]
          %v313 = vld [vmem:[%s268 + $0x68] sm:$0xff]
          %v314 = vld [vmem:[%s268 + $0x70] sm:$0xff]
          %v315 = vld [vmem:[%s268 + $0x78] sm:$0xff]
          %v316 = vld [vmem:[%s284] sm:$0xff]
          %v317 = vld [vmem:[%s284 + $0x8] sm:$0xff]
          %v318 = vld [vmem:[%s284 + $0x10] sm:$0xff]
          %v319 = vld [vmem:[%s284 + $0x18] sm:$0xff]
          %v320 = vld [vmem:[%s284 + $0x20] sm:$0xff]
          %v321 = vld [vmem:[%s284 + $0x28] sm:$0xff]
          %v322 = vld [vmem:[%s284 + $0x30] sm:$0xff]
          %v323 = vld [vmem:[%s284 + $0x38] sm:$0xff]
          %v324 = vld [vmem:[%s284 + $0x40] sm:$0xff]
          %v325 = vld [vmem:[%s284 + $0x48] sm:$0xff]
          %v326 = vld [vmem:[%s284 + $0x50] sm:$0xff]
          %v327 = vld [vmem:[%s284 + $0x58] sm:$0xff]
          %v328 = vld [vmem:[%s284 + $0x60] sm:$0xff]
          %v329 = vld [vmem:[%s284 + $0x68] sm:$0xff]
          %v330 = vld [vmem:[%s284 + $0x70] sm:$0xff]
          %v331 = vld [vmem:[%s284 + $0x78] sm:$0xff]
          %v332 = vlaneseq
          %v333 = vshrl.u32 %v332, 7
          %v334 = vadd.s32 %v333, 8
          %v335 = vadd.s32 %v333, 16
          %v336 = vadd.s32 %v333, 24
          %v337 = vadd.s32 %v333, 32
          %v338 = vadd.s32 %v333, 40
          %v339 = vadd.s32 %v333, 48
          %v340 = vadd.s32 %v333, 56
          %v341 = vadd.s32 %v333, 64
          %v342 = vadd.s32 %v333, 72
          %v343 = vadd.s32 %v333, 80
          %v344 = vadd.s32 %v333, 88
          %v345 = vadd.s32 %v333, 96
          %v346 = vadd.s32 %v333, 104
          %v347 = vadd.s32 %v333, 112
          %v348 = vadd.s32 %v333, 120
          %vm349 = vcmp.lt.s32.totalorder %v333, 73
          %vm350 = vcmp.lt.s32.totalorder %v334, 73
          %vm351 = vcmp.lt.s32.totalorder %v335, 73
          %vm352 = vcmp.lt.s32.totalorder %v336, 73
          %vm353 = vcmp.lt.s32.totalorder %v337, 73
          %vm354 = vcmp.lt.s32.totalorder %v338, 73
          %vm355 = vcmp.lt.s32.totalorder %v339, 73
          %vm356 = vcmp.lt.s32.totalorder %v340, 73
          %vm357 = vcmp.lt.s32.totalorder %v341, 73
          %vm358 = vcmp.lt.s32.totalorder %v342, 73
          %vm359 = vcmp.lt.s32.totalorder %v343, 73
          %vm360 = vcmp.lt.s32.totalorder %v344, 73
          %vm361 = vcmp.lt.s32.totalorder %v345, 73
          %vm362 = vcmp.lt.s32.totalorder %v346, 73
          %vm363 = vcmp.lt.s32.totalorder %v347, 73
          %vm364 = vcmp.lt.s32.totalorder %v348, 73
          %v365 = vsel %vm349, %v300, 0.0
          %v366 = vsel %vm350, %v301, 0.0
          %v367 = vsel %vm351, %v302, 0.0
          %v368 = vsel %vm352, %v303, 0.0
          %v369 = vsel %vm353, %v304, 0.0
          %v370 = vsel %vm354, %v305, 0.0
          %v371 = vsel %vm355, %v306, 0.0
          %v372 = vsel %vm356, %v307, 0.0
          %v373 = vsel %vm357, %v308, 0.0
          %v374 = vsel %vm358, %v309, 0.0
          %v375 = vsel %vm359, %v310, 0.0
          %v376 = vsel %vm360, %v311, 0.0
          %v377 = vsel %vm361, %v312, 0.0
          %v378 = vsel %vm362, %v313, 0.0
          %v379 = vsel %vm363, %v314, 0.0
          %v380 = vsel %vm364, %v315, 0.0
          %v381 = vsel %vm349, %v316, 0.0
          %v382 = vsel %vm350, %v317, 0.0
          %v383 = vsel %vm351, %v318, 0.0
          %v384 = vsel %vm352, %v319, 0.0
          %v385 = vsel %vm353, %v320, 0.0
          %v386 = vsel %vm354, %v321, 0.0
          %v387 = vsel %vm355, %v322, 0.0
          %v388 = vsel %vm356, %v323, 0.0
          %v389 = vsel %vm357, %v324, 0.0
          %v390 = vsel %vm358, %v325, 0.0
          %v391 = vsel %vm359, %v326, 0.0
          %v392 = vsel %vm360, %v327, 0.0
          %v393 = vsel %vm361, %v328, 0.0
          %v394 = vsel %vm362, %v329, 0.0
          %v395 = vsel %vm363, %v330, 0.0
          %v396 = vsel %vm364, %v331, 0.0
          %v397 = vsub.f32 %v381, %v365
          %v398 = vsub.f32 %v382, %v366
          %v399 = vsub.f32 %v383, %v367
          %v400 = vsub.f32 %v384, %v368
          %v401 = vsub.f32 %v385, %v369
          %v402 = vsub.f32 %v386, %v370
          %v403 = vsub.f32 %v387, %v371
          %v404 = vsub.f32 %v388, %v372
          %v405 = vsub.f32 %v389, %v373
          %v406 = vsub.f32 %v390, %v374
          %v407 = vsub.f32 %v391, %v375
          %v408 = vsub.f32 %v392, %v376
          %v409 = vsub.f32 %v393, %v377
          %v410 = vsub.f32 %v394, %v378
          %v411 = vsub.f32 %v395, %v379
          %v412 = vsub.f32 %v396, %v380
          %v413 = vmul.f32 %v365, %v365
          %v414 = vmul.f32 %v366, %v366
          %v415 = vmul.f32 %v367, %v367
          %v416 = vmul.f32 %v368, %v368
          %v417 = vmul.f32 %v369, %v369
          %v418 = vmul.f32 %v370, %v370
          %v419 = vmul.f32 %v371, %v371
          %v420 = vmul.f32 %v372, %v372
          %v421 = vmul.f32 %v373, %v373
          %v422 = vmul.f32 %v374, %v374
          %v423 = vmul.f32 %v375, %v375
          %v424 = vmul.f32 %v376, %v376
          %v425 = vmul.f32 %v377, %v377
          %v426 = vmul.f32 %v378, %v378
          %v427 = vmul.f32 %v379, %v379
          %v428 = vmul.f32 %v380, %v380
          %v429 = vadd.f32 %v413, %v414
          %v430 = vadd.f32 %v429, %v415
          %v431 = vadd.f32 %v430, %v416
          %v432 = vadd.f32 %v431, %v417
          %v433 = vadd.f32 %v432, %v418
          %v434 = vadd.f32 %v433, %v419
          %v435 = vadd.f32 %v434, %v420
          %v436 = vadd.f32 %v435, %v421
          %v437 = vadd.f32 %v436, %v422
          %v438 = vadd.f32 %v437, %v423
          %v439 = vadd.f32 %v438, %v424
          %v440 = vadd.f32 %v439, %v425
          %v441 = vadd.f32 %v440, %v426
          %v442 = vadd.f32 %v441, %v427
          %v443 = vadd.f32 %v442, %v428
          %v444 = vadd.f32 %v443, 0.0
          %v445 = vmul.f32 %v397, %v397
          %v446 = vmul.f32 %v398, %v398
          %v447 = vmul.f32 %v399, %v399
          %v448 = vmul.f32 %v400, %v400
          %v449 = vmul.f32 %v401, %v401
          %v450 = vmul.f32 %v402, %v402
          %v451 = vmul.f32 %v403, %v403
          %v452 = vmul.f32 %v404, %v404
          %v453 = vmul.f32 %v405, %v405
          %v454 = vmul.f32 %v406, %v406
          %v455 = vmul.f32 %v407, %v407
          %v456 = vmul.f32 %v408, %v408
          %v457 = vmul.f32 %v409, %v409
          %v458 = vmul.f32 %v410, %v410
          %v459 = vmul.f32 %v411, %v411
          %v460 = vmul.f32 %v412, %v412
          %v461 = vadd.f32 %v445, %v446
          %v462 = vadd.f32 %v461, %v447
          %v463 = vadd.f32 %v462, %v448
          %v464 = vadd.f32 %v463, %v449
          %v465 = vadd.f32 %v464, %v450
          %v466 = vadd.f32 %v465, %v451
          %v467 = vadd.f32 %v466, %v452
          %v468 = vadd.f32 %v467, %v453
          %v469 = vadd.f32 %v468, %v454
          %v470 = vadd.f32 %v469, %v455
          %v471 = vadd.f32 %v470, %v456
          %v472 = vadd.f32 %v471, %v457
          %v473 = vadd.f32 %v472, %v458
          %v474 = vadd.f32 %v473, %v459
          %v475 = vadd.f32 %v474, %v460
          %v476 = vadd.f32 %v475, 0.0
          %v477 = vld [vmem:[%s249] sm:$0xff]
          %v478 = vadd.f32 %v477, %v444
          %479 = vst [vmem:[%s249] sm:$0xff] %v478
          %v480 = vld [vmem:[%s256] sm:$0xff]
          %v481 = vadd.f32 %v480, %v476
          %482 = vst [vmem:[%s256] sm:$0xff] %v481
        $region36: #{tpu_custom_call.1} parent=27 // pred_fallthru
          _
        %s483 = sand.u32 %s110, 1
        %s484 = scalar_lea.sflag [#allocation3], %s483
        %s485 = sand.u32 %s110, 1
        %s486 = smul.addr %s485, 8
        %s487 = scalar_lea.vmem [#allocation2], %s486
        %s488 = sand.u32 %s138, 1
        %s489 = scalar_lea.sflag [#allocation5], %s488
        %s490 = sand.u32 %s138, 1
        %s491 = smul.addr %s490, 8
        %s492 = scalar_lea.vmem [#allocation4], %s491
        // Predicated region
        $region37: #{tpu_custom_call.1} parent=27 // pred_check
          %p493 = pneg %p120
        $region38: #{tpu_custom_call.1} parent=27 // pred_check_branch
          %495 = sbr.rel (%p493) target = $region40
        $region39: #{tpu_custom_call.1} parent=27 // pred_region
          %s497 = ssub.s32 128, 128
          %498 = vsyncadd %s484, %s497
          %s499 = smul.addr %s26, 2
          %s500 = sadd.s32 %s27, %s499
          %s501 = smul.addr %s500, 128
          %s502 = scalar_lea.hbm %s2, %s501
          %s504 = sshll.u32 %s487, 4
          %s505 = int_to_ptr.vmem [resolvable:$true] %s504
          %507 = dma.vmem_to_hbm [thread:$0]  %s505, 128, %s502, %s484
        $region40: #{tpu_custom_call.1} parent=27 // pred_fallthru
          _
        // Predicated region
        $region41: #{tpu_custom_call.1} parent=27 // pred_check
          %p508 = pneg %p148
        $region42: #{tpu_custom_call.1} parent=27 // pred_check_branch
          %510 = sbr.rel (%p508) target = $region44
        $region43: #{tpu_custom_call.1} parent=27 // pred_region
          %s512 = ssub.s32 128, 128
          %513 = vsyncadd %s489, %s512
          %s514 = smul.addr %s26, 2
          %s515 = sadd.s32 %s27, %s514
          %s516 = smul.addr %s515, 128
          %s517 = scalar_lea.hbm %s3, %s516
          %s519 = sshll.u32 %s492, 4
          %s520 = int_to_ptr.vmem [resolvable:$true] %s519
          %522 = dma.vmem_to_hbm [thread:$0]  %s520, 128, %s517, %s489
        $region44: #{tpu_custom_call.1} parent=27 // pred_fallthru
          _
      $region28: #{tpu_custom_call.1} parent=5 // pred_fallthru
        _
      %p523 = scmp.le.s32.totalorder 2, %s16
      // Predicated region
      $region45: #{tpu_custom_call.1} parent=5 // pred_check
        %p524 = pneg %p523
      $region46: #{tpu_custom_call.1} parent=5 // pred_check_branch
        %526 = sbr.rel (%p524) target = $region48
      $region47: #{tpu_custom_call.1} parent=5 // pred_region
        %s527 = ssub.s32 %s16, 2
        // Predicated region
        $region49: #{tpu_custom_call.1} parent=47 // pred_check
          %p528 = pneg %p126
        $region50: #{tpu_custom_call.1} parent=47 // pred_check_branch
          %530 = sbr.rel (%p528) target = $region52
        $region51: #{tpu_custom_call.1} parent=47 // pred_region
          %s531 = sand.u32 %s111, 1
          %s532 = scalar_lea.sflag [#allocation3], %s531
          %s533 = sand.u32 %s111, 1
          %s534 = smul.addr %s533, 8
          %s535 = scalar_lea.vmem [#allocation2], %s534
          %536 = dma.done %s532, 128
        $region52: #{tpu_custom_call.1} parent=47 // pred_fallthru
          _
        // Predicated region
        $region53: #{tpu_custom_call.1} parent=47 // pred_check
          %p537 = pneg %p154
        $region54: #{tpu_custom_call.1} parent=47 // pred_check_branch
          %539 = sbr.rel (%p537) target = $region56
        $region55: #{tpu_custom_call.1} parent=47 // pred_region
          %s540 = sand.u32 %s139, 1
          %s541 = scalar_lea.sflag [#allocation5], %s540
          %s542 = sand.u32 %s139, 1
          %s543 = smul.addr %s542, 8
          %s544 = scalar_lea.vmem [#allocation4], %s543
          %545 = dma.done %s541, 128
        $region56: #{tpu_custom_call.1} parent=47 // pred_fallthru
          _
      $region48: #{tpu_custom_call.1} parent=5 // pred_fallthru
        _
    $region6: #{tpu_custom_call.1} parent=1 // loop_footer
      %s20 = sadd.s32 1, %s16
    $region7: #{tpu_custom_call.1} parent=1 // loop_footer_branch
      %15 = sbr.rel target = $region3
    $region8: #{tpu_custom_call.1} parent=1 // loop_exit
      _
    %546 = vsyncpa [#allocation3], 1
    %s547 = scalar_lea.sflag [#allocation3], 1
    %548 = vsyncpa %s547, 1
    %549 = vsyncpa [#allocation5], 1
    %s550 = scalar_lea.sflag [#allocation5], 1
    %551 = vsyncpa %s550, 1

</llo_original>
